<compile_context>
chip_gen: v7x
topology: tpu7x:2x2x1
jax: 0.10.0
libtpu: 0.0.40
codegen_flags: <defaults>
</compile_context>

<pallas_src>
import math
import jax
import jax.numpy as jnp
from jax.experimental import pallas as pl
from jax.experimental.pallas import tpu as pltpu


# ------------------------------------------------------------------ kernel ---

def _pe_add_kernel(x_ref, pe_ref, o_ref):
    # x_ref : (TB, TN) tile of the flattened (B, S*D) input
    # pe_ref: (1,  TN) matching tile of the flattened positional encoding
    # Pure VPU elementwise add; pe broadcasts across the row (batch) axis.
    o_ref[...] = x_ref[...] + pe_ref[...]


# --------------------------------------------------------------- pe buffer ---

def make_positional_encoding(d_model: int, max_len: int = 50) -> jnp.ndarray:
    """Deterministic buffer setup identical to the PyTorch __init__ (odd d_model safe)."""
    position = jnp.arange(0, max_len, dtype=jnp.float32)[:, None]            # (max_len, 1)
    div_term = jnp.exp(
        jnp.arange(0, d_model, 2, dtype=jnp.float32) * (-math.log(10000.0) / d_model)
    )                                                                         # (ceil(d/2),)
    angles = position * div_term                                              # (max_len, ceil(d/2))
    pe = jnp.zeros((max_len, d_model), dtype=jnp.float32)
    pe = pe.at[:, 0::2].set(jnp.sin(angles))
    pe = pe.at[:, 1::2].set(jnp.cos(angles)[:, : d_model // 2])               # floor(d/2) cols
    return pe[None, :, :]                                                     # (1, max_len, d_model)


# ------------------------------------------------------------- tile picker ---

_BLOCK_BYTES_BUDGET = 1 << 20  # ~1 MiB per x/out block; 3 refs x 2 buffers stays well under VMEM limits


def _largest_aligned_divisor(n: int, align: int, cap: int):
    """Largest divisor of n that is a multiple of `align` and <= cap (None if none)."""
    best = None
    k = align
    limit = min(n, cap)
    while k <= limit:
        if n % k == 0:
            best = k
        k += align
    return best


def _pick_tiles(B: int, N: int, itemsize: int):
    # Lane tile: multiple of 128 dividing N, up to 4096 elems (lane-dense, unmasked vst).
    tn = _largest_aligned_divisor(N, 128, 4096)
    if tn is None:
        # TODO(synk): S*D not a multiple of 128 -> fall back to full-extent lane dim
        # (correct, but stores may be masked for very small S*D).
        tn = N
    # Row tile: multiple of 8 dividing B when possible (else full B), sized to the VMEM budget.
    max_rows = max(1, _BLOCK_BYTES_BUDGET // (tn * itemsize))
    if B >= 8 and B % 8 == 0:
        tb = _largest_aligned_divisor(B, 8, max(8, max_rows)) or 8
    else:
        tb = B
    return tb, tn


# ----------------------------------------------------------------- forward ---

def positional_encoding_forward(x: jnp.ndarray, pe: jnp.ndarray) -> jnp.ndarray:
    """x: (B, S, D); pe: (1, max_len, D). Returns x + pe[:, :S] via a Pallas kernel."""
    B, S, D = x.shape
    if pe.shape[1] < S:
        raise ValueError(f"sequence length {S} exceeds positional-encoding max_len {pe.shape[1]}")
    if pe.shape[2] != D:
        raise ValueError(f"d_model mismatch: x has {D}, pe has {pe.shape[2]}")

    N = S * D
    itemsize = jnp.dtype(x.dtype).itemsize
    tb, tn = _pick_tiles(B, N, itemsize)

    # Wrapper-side layout plumbing (plain-JAX glue, contiguous reshapes).
    x_flat = x.reshape(B, N)
    pe_flat = pe[:, :S, :].astype(x.dtype).reshape(1, N)

    grid = (B // tb, N // tn)

    y_flat = pl.pallas_call(
        _pe_add_kernel,
        out_shape=jax.ShapeDtypeStruct((B, N), x.dtype),
        grid=grid,
        in_specs=[
            pl.BlockSpec((tb, tn), lambda i, j: (i, j)),   # x tile
            pl.BlockSpec((1, tn), lambda i, j: (0, j)),    # pe tile (broadcast across rows)
        ],
        out_specs=pl.BlockSpec((tb, tn), lambda i, j: (i, j)),
        compiler_params=pltpu.CompilerParams(
            dimension_semantics=("parallel", "parallel"),
        ),
    )(x_flat, pe_flat)

    return y_flat.reshape(B, S, D)


# -------------------------------------------------------------------- main ---

if __name__ == "__main__":
    B, S, D = 2, 8, 32
    max_len = 50

    key = jax.random.PRNGKey(0)
    x = jax.random.normal(key, (B, S, D), dtype=jnp.float32)
    pe = make_positional_encoding(D, max_len=max_len)

    y = positional_encoding_forward(x, pe)
    y = jax.block_until_ready(y)

    # Reference check (pure JAX, same semantics as the PyTorch forward).
    y_ref = x + pe[:, :S, :]
    assert y.shape == (B, S, D)
    assert jnp.allclose(y, y_ref, atol=1e-6, rtol=1e-6)

    print("KERNEL_OK")
</pallas_src>

<mosaic_0001>
module attributes {stable_mosaic.version = 11 : i64} {
  func.func @_pe_add_kernel(%arg0: i32, %arg1: i32, %arg2: memref<2x256xf32, #tpu.memory_space<vmem>>, %arg3: memref<1x256xf32, #tpu.memory_space<vmem>>, %arg4: memref<2x256xf32, #tpu.memory_space<vmem>>) attributes {dimension_semantics = [#tpu.dimension_semantics<parallel>, #tpu.dimension_semantics<parallel>], iteration_bounds = array<i64: 1, 1>, scalar_prefetch = 0 : i64, scratch_operands = 0 : i64, tpu.core_type = #tpu.core_type<tc>, window_params = [{transform_indices = @transform_0, window_bounds = array<i64: 2, 256>}, {transform_indices = @transform_1, window_bounds = array<i64: 1, 256>}, {transform_indices = @transform_2, window_bounds = array<i64: 2, 256>}]} {
    %c0 = arith.constant 0 : index
    %c0_0 = arith.constant 0 : index
    %0 = vector.load %arg2[%c0, %c0_0] : memref<2x256xf32, #tpu.memory_space<vmem>>, vector<2x256xf32>
    %c0_1 = arith.constant 0 : index
    %c0_2 = arith.constant 0 : index
    %1 = vector.load %arg3[%c0_1, %c0_2] : memref<1x256xf32, #tpu.memory_space<vmem>>, vector<1x256xf32>
    %2 = vector.broadcast %1 : vector<1x256xf32> to vector<2x256xf32>
    %3 = arith.addf %0, %2 : vector<2x256xf32>
    %c0_3 = arith.constant 0 : index
    %c0_4 = arith.constant 0 : index
    %4 = vector.load %arg4[%c0_3, %c0_4] : memref<2x256xf32, #tpu.memory_space<vmem>>, vector<2x256xf32>
    tpu.vector_store %arg4[%c0_3, %c0_4], %3 {strides = array<i32>} : memref<2x256xf32, #tpu.memory_space<vmem>>, vector<2x256xf32>,
    return
  }
  func.func @transform_0(%arg0: i32, %arg1: i32) -> (i32, i32) {
    %c0_i32 = arith.constant 0 : i32
    return %arg0, %arg1 : i32, i32
  }
  func.func @transform_1(%arg0: i32, %arg1: i32) -> (i32, i32) {
    %c0_i32 = arith.constant 0 : i32
    %c0_i32_0 = arith.constant 0 : i32
    return %c0_i32, %arg1 : i32, i32
  }
  func.func @transform_2(%arg0: i32, %arg1: i32) -> (i32, i32) {
    %c0_i32 = arith.constant 0 : i32
    return %arg0, %arg1 : i32, i32
  }
}

</mosaic_0001>

<llo_original>
// kernel: tpu_custom_call.1
$region0: #{tpu_custom_call.1}
  #allocation0 [shape = 'u32[]', space=smem, size = 0x4, offset = 0x4, fixed_abs, tag = 'smem constant byte address 0x4 - core index']
  #allocation1 [shape = 'u32[144,128]{1,0:T(1,128)}', space=vmem, size = 0x12000, scoped, tag = 'internal scratch']
  %s0 = inlined_call_operand.hbm [shape: f32[2,256], index: 0, kind: input, shape index: {}]
  %s1 = inlined_call_operand.vmem [shape: f32[1,256], index: 1, kind: input, shape index: {}]
  %s2 = inlined_call_operand.hbm [shape: f32[2,256], index: 2, kind: output, shape index: {}]
  %s3 = sld [smem:[#allocation0]]
  $region22: #{tpu_custom_call.1} parent=0
    _
  %s5 = ssub.s32 1, %s3
  %s6 = scalar_select 0, %s5, %s3
  $region1: #{tpu_custom_call.1} parent=0
    #allocation2 [shape = 'u8[2048]{0}', space=vmem, size = 0x800, scoped, tag = 'input window, operand 0, single buffered']
    #allocation3 [shape = 's32[1]{0}', space=sflag, size = 0x4, scoped, tag = 'scoped memory for tpu_custom_call.1']
    #allocation4 [shape = 's32[1]{0}', space=sflag, size = 0x4, scoped, tag = 'scoped memory for tpu_custom_call.1']
    #allocation5 [shape = 'u8[2048]{0}', space=vmem, size = 0x800, scoped, tag = 'output window, operand 0, single buffered']
    %7 = vsyncpa [#allocation3], 0
    %8 = vsyncpa [#allocation4], 0
    // Predicated region
    $region2: #{tpu_custom_call.1} parent=1 // pred_check
      _
    $region3: #{tpu_custom_call.1} parent=1 // pred_check_branch
      %10 = sbr.rel (0) target = $region5
    $region4: #{tpu_custom_call.1} parent=1 // pred_region
      %s12 = ssub.s32 64, 64
      %13 = vsyncadd [#allocation3], %s12
      %s15 = sshll.u32 [#allocation2], 4
      %s16 = int_to_ptr.vmem [resolvable:$true] %s15
      %18 = dma.hbm_to_vmem [thread:$0]  %s0, 64, %s16, [#allocation3]
    $region5: #{tpu_custom_call.1} parent=1 // pred_fallthru
      _
    // Predicated region
    $region6: #{tpu_custom_call.1} parent=1 // pred_check
      _
    $region7: #{tpu_custom_call.1} parent=1 // pred_check_branch
      %20 = sbr.rel (0) target = $region9
    $region8: #{tpu_custom_call.1} parent=1 // pred_region
      _
    $region9: #{tpu_custom_call.1} parent=1 // pred_fallthru
      _
    // Predicated region
    $region10: #{tpu_custom_call.1} parent=1 // pred_check
      _
    $region11: #{tpu_custom_call.1} parent=1 // pred_check_branch
      %22 = sbr.rel (0) target = $region13
    $region12: #{tpu_custom_call.1} parent=1 // pred_region
      %23 = dma.done [#allocation3], 64
    $region13: #{tpu_custom_call.1} parent=1 // pred_fallthru
      _
    %v24 = vld [vmem:[#allocation2] sm:$0xf]
    %v25 = vld [vmem:[%s1] sm:$0x3]
    %v27 = vlaneseq
    %v28 = vshrl.u32 %v27, 7
    %v29 = vsub.s32 0, %v28
    %v30 = vrot.slane %v25, %v29
    %v31 = vlaneseq
    %v32 = vshrl.u32 %v31, 7
    %v33 = vsub.s32 1, %v32
    %v34 = vrot.slane %v25, %v33
    %v35 = vcombine.low %v30, %v34
    %v37 = vunpack.c.l.s4 1983009808
    %v38 = vunpack.c.0.s8 %v37
    %v39 = vlaneseq
    %v40 = vshrl.u32 %v39, 7
    %v41 = vsub.s32 %v38, %v40
    %v42 = vrot.slane %v35, %v41
    %v44 = vadd.f32 %v24, %v42
    %45 = vst [vmem:[#allocation5] sm:$0xf] %v44
    // Predicated region
    $region14: #{tpu_custom_call.1} parent=1 // pred_check
      _
    $region15: #{tpu_custom_call.1} parent=1 // pred_check_branch
      %47 = sbr.rel (0) target = $region17
    $region16: #{tpu_custom_call.1} parent=1 // pred_region
      %s49 = ssub.s32 64, 64
      %50 = vsyncadd [#allocation4], %s49
      %s52 = sshll.u32 [#allocation5], 4
      %s53 = int_to_ptr.vmem [resolvable:$true] %s52
      %55 = dma.vmem_to_hbm [thread:$0]  %s53, 64, %s2, [#allocation4]
    $region17: #{tpu_custom_call.1} parent=1 // pred_fallthru
      _
    // Predicated region
    $region18: #{tpu_custom_call.1} parent=1 // pred_check
      _
    $region19: #{tpu_custom_call.1} parent=1 // pred_check_branch
      %57 = sbr.rel (0) target = $region21
    $region20: #{tpu_custom_call.1} parent=1 // pred_region
      %58 = dma.done [#allocation4], 64
    $region21: #{tpu_custom_call.1} parent=1 // pred_fallthru
      _
    %59 = vsyncpa [#allocation3], 1
    %60 = vsyncpa [#allocation4], 1

</llo_original>
